<compile_context>
chip_gen: v6e
topology: v6e:2x2x1
jax: 0.10.0
libtpu: 0.0.40
codegen_flags: <defaults>
</compile_context>

<pallas_src>
import functools
import math

import jax
import jax.numpy as jnp
from jax.experimental import pallas as pl
from jax.experimental.pallas import tpu as pltpu


# ------------------------------- Pallas kernel -------------------------------

def _upscale_conv_kernel(p_ref, w_ref, b_ref, o_ref, *, ow, m):
    """Fused 3x3 conv over the upsampled+reflect-padded image of one batch element.

    p_ref: (1, 3*Cin, PH*OW)   width-im2col'd padded image (K axis = (kx, ci))
    w_ref: (3, Cout_p, 3*Cin)  per-row-tap weights (Cout padded to a multiple of 8)
    b_ref: (Cout_p, 1)         bias
    o_ref: (1, Cout_p, OH*OW)  output, lane axis = flattened spatial (lane-dense)
    """
    acc = None
    for ky in range(3):  # three row taps: overlapping windows of the VMEM-resident image
        rhs = p_ref[0, :, pl.ds(ky * ow, m)]                      # (3*Cin, OH*OW)
        d = jnp.dot(w_ref[ky], rhs, preferred_element_type=jnp.float32)
        acc = d if acc is None else acc + d
    o_ref[0] = (acc + b_ref[...]).astype(o_ref.dtype)


# ------------------------------ block wrapper --------------------------------

def upscale_block_apply(x, w, b):
    """UpscaleBlock forward. x: (N, Cin, H, W) f32 NCHW. w: (Cout, Cin, 3, 3). b: (Cout,)."""
    n, cin, h, w_in = x.shape
    cout = w.shape[0]
    oh, ow = 2 * h, 2 * w_in
    ph, pw = oh + 2, ow + 2
    m = oh * ow
    k3 = 3 * cin
    cout_p = ((cout + 7) // 8) * 8          # sublane-aligned out-channel axis

    # Nearest-x2 upsample + ReflectionPad2d(1) fused into one gather:
    # padded coordinate p -> upsampled coordinate (reflect) -> input coordinate (//2).
    def src_index(p_len, o_len):
        u = jnp.abs(jnp.arange(p_len) - 1)
        u = jnp.where(u > o_len - 1, 2 * (o_len - 1) - u, u)
        return u // 2

    rmap = src_index(ph, oh)
    cmap = src_index(pw, ow)
    xg = x[:, :, rmap, :][:, :, :, cmap]                     # (N, Cin, PH, PW)

    # Width-only im2col (3x, not 9x): K axis ordered (kx, ci); the row (ky) taps stay
    # implicit and are accumulated inside the kernel.
    taps = [xg[:, :, :, kx:kx + ow] for kx in range(3)]      # 3 x (N, Cin, PH, OW)
    p_t = jnp.stack(taps, axis=1).reshape(n, k3, ph * ow)    # (N, 3*Cin, PH*OW)

    # Per-row-tap weight matrices with matching (kx, ci) K ordering.
    w_t = jnp.transpose(w, (2, 0, 3, 1)).reshape(3, cout, k3)
    w_t = jnp.pad(w_t, ((0, 0), (0, cout_p - cout), (0, 0)))
    b_p = jnp.pad(b, (0, cout_p - cout)).reshape(cout_p, 1)

    kernel = functools.partial(_upscale_conv_kernel, ow=ow, m=m)
    out = pl.pallas_call(
        kernel,
        out_shape=jax.ShapeDtypeStruct((n, cout_p, m), jnp.float32),
        grid=(n,),
        in_specs=[
            pl.BlockSpec((1, k3, ph * ow), lambda i: (i, 0, 0)),
            pl.BlockSpec((3, cout_p, k3), lambda i: (0, 0, 0)),
            pl.BlockSpec((cout_p, 1), lambda i: (0, 0)),
        ],
        out_specs=pl.BlockSpec((1, cout_p, m), lambda i: (i, 0, 0)),
        compiler_params=pltpu.CompilerParams(dimension_semantics=("parallel",)),
    )(p_t.astype(jnp.float32), w_t.astype(jnp.float32), b_p.astype(jnp.float32))

    # (N, Cout, OH*OW) is already NCHW-ordered: reshape only, no transpose.
    return out[:, :cout, :].reshape(n, cout, oh, ow)


# ------------------------------ pure-JAX reference ---------------------------

def upscale_block_reference(x, w, b):
    up = jnp.repeat(jnp.repeat(x, 2, axis=2), 2, axis=3)
    pad = jnp.pad(up, ((0, 0), (0, 0), (1, 1), (1, 1)), mode="reflect")
    out = jax.lax.conv_general_dilated(
        pad, w, window_strides=(1, 1), padding="VALID",
        dimension_numbers=("NCHW", "OIHW", "NCHW"),
        precision=jax.lax.Precision.HIGHEST)
    return out + b.reshape(1, -1, 1, 1)


# ----------------------------------- main -------------------------------------

if __name__ == "__main__":
    n, cin, h, w_sp = 2, 4, 16, 16
    cout = 8

    key = jax.random.PRNGKey(0)
    kx_, kw_, kb_ = jax.random.split(key, 3)
    x = jax.random.normal(kx_, (n, cin, h, w_sp), jnp.float32)
    bound = 1.0 / math.sqrt(cin * 9)
    w = jax.random.uniform(kw_, (cout, cin, 3, 3), jnp.float32, -bound, bound)
    b = jax.random.uniform(kb_, (cout,), jnp.float32, -bound, bound)

    fwd = jax.jit(upscale_block_apply)
    out = jax.block_until_ready(fwd(x, w, b))

    assert out.shape == (n, cout, 2 * h, 2 * w_sp), out.shape
    assert out.dtype == jnp.float32
    assert bool(jnp.all(jnp.isfinite(out)))

    ref = upscale_block_reference(x, w, b)
    max_err = float(jnp.max(jnp.abs(out - ref)))
    assert max_err < 3e-2, f"max abs error vs reference: {max_err}"

    print("KERNEL_OK")
</pallas_src>

<mosaic_0001>
module attributes {stable_mosaic.version = 11 : i64} {
  func.func @_upscale_conv_kernel(%arg0: i32, %arg1: memref<1x12x1088xf32, #tpu.memory_space<vmem>>, %arg2: memref<3x8x12xf32, #tpu.memory_space<vmem>>, %arg3: memref<8x1xf32, #tpu.memory_space<vmem>>, %arg4: memref<1x8x1024xf32, #tpu.memory_space<vmem>>) attributes {dimension_semantics = [#tpu.dimension_semantics<parallel>], iteration_bounds = array<i64: 2>, scalar_prefetch = 0 : i64, scratch_operands = 0 : i64, tpu.core_type = #tpu.core_type<tc>, window_params = [{transform_indices = @transform_0, window_bounds = array<i64: 1, 12, 1088>}, {pipeline_mode = #tpu.pipeline_mode<synchronous>, transform_indices = @transform_1, window_bounds = array<i64: 3, 8, 12>}, {pipeline_mode = #tpu.pipeline_mode<synchronous>, transform_indices = @transform_2, window_bounds = array<i64: 8, 1>}, {transform_indices = @transform_3, window_bounds = array<i64: 1, 8, 1024>}]} {
    %c0 = arith.constant 0 : index
    %c0_0 = arith.constant 0 : index
    %c0_1 = arith.constant 0 : index
    %0 = vector.load %arg1[%c0, %c0_0, %c0_1] : memref<1x12x1088xf32, #tpu.memory_space<vmem>>, vector<1x12x1024xf32>
    %1 = vector.shape_cast %0 : vector<1x12x1024xf32> to vector<12x1024xf32>
    %c0_2 = arith.constant 0 : index
    %c0_3 = arith.constant 0 : index
    %c0_4 = arith.constant 0 : index
    %2 = vector.load %arg2[%c0_2, %c0_3, %c0_4] : memref<3x8x12xf32, #tpu.memory_space<vmem>>, vector<1x8x12xf32>
    %3 = vector.shape_cast %2 : vector<1x8x12xf32> to vector<8x12xf32>
    %cst = arith.constant dense<0.000000e+00> : vector<8x1024xf32>
    %4 = tpu.matmul %3, %1, %cst {dimension_numbers = #tpu.dot_dimension_numbers<[1], [0], [0], [1], [0, 0, 1, 1], [], []>} : vector<8x12xf32>, vector<12x1024xf32>, vector<8x1024xf32> -> vector<8x1024xf32>
    %c0_5 = arith.constant 0 : index
    %c0_6 = arith.constant 0 : index
    %c32 = arith.constant 32 : index
    %5 = vector.load %arg1[%c0_5, %c0_6, %c32] : memref<1x12x1088xf32, #tpu.memory_space<vmem>>, vector<1x12x1024xf32>
    %6 = vector.shape_cast %5 : vector<1x12x1024xf32> to vector<12x1024xf32>
    %c1 = arith.constant 1 : index
    %c0_7 = arith.constant 0 : index
    %c0_8 = arith.constant 0 : index
    %7 = vector.load %arg2[%c1, %c0_7, %c0_8] : memref<3x8x12xf32, #tpu.memory_space<vmem>>, vector<1x8x12xf32>
    %8 = vector.shape_cast %7 : vector<1x8x12xf32> to vector<8x12xf32>
    %cst_9 = arith.constant dense<0.000000e+00> : vector<8x1024xf32>
    %9 = tpu.matmul %8, %6, %cst_9 {dimension_numbers = #tpu.dot_dimension_numbers<[1], [0], [0], [1], [0, 0, 1, 1], [], []>} : vector<8x12xf32>, vector<12x1024xf32>, vector<8x1024xf32> -> vector<8x1024xf32>
    %10 = arith.addf %4, %9 : vector<8x1024xf32>
    %c0_10 = arith.constant 0 : index
    %c0_11 = arith.constant 0 : index
    %c64 = arith.constant 64 : index
    %11 = vector.load %arg1[%c0_10, %c0_11, %c64] : memref<1x12x1088xf32, #tpu.memory_space<vmem>>, vector<1x12x1024xf32>
    %12 = vector.shape_cast %11 : vector<1x12x1024xf32> to vector<12x1024xf32>
    %c2 = arith.constant 2 : index
    %c0_12 = arith.constant 0 : index
    %c0_13 = arith.constant 0 : index
    %13 = vector.load %arg2[%c2, %c0_12, %c0_13] : memref<3x8x12xf32, #tpu.memory_space<vmem>>, vector<1x8x12xf32>
    %14 = vector.shape_cast %13 : vector<1x8x12xf32> to vector<8x12xf32>
    %cst_14 = arith.constant dense<0.000000e+00> : vector<8x1024xf32>
    %15 = tpu.matmul %14, %12, %cst_14 {dimension_numbers = #tpu.dot_dimension_numbers<[1], [0], [0], [1], [0, 0, 1, 1], [], []>} : vector<8x12xf32>, vector<12x1024xf32>, vector<8x1024xf32> -> vector<8x1024xf32>
    %16 = arith.addf %10, %15 : vector<8x1024xf32>
    %c0_15 = arith.constant 0 : index
    %c0_16 = arith.constant 0 : index
    %17 = vector.load %arg3[%c0_15, %c0_16] : memref<8x1xf32, #tpu.memory_space<vmem>>, vector<8x1xf32>
    %18 = vector.broadcast %17 : vector<8x1xf32> to vector<8x1024xf32>
    %19 = arith.addf %16, %18 : vector<8x1024xf32>
    %c0_17 = arith.constant 0 : index
    %c0_18 = arith.constant 0 : index
    %c0_19 = arith.constant 0 : index
    %20 = vector.load %arg4[%c0_17, %c0_18, %c0_19] : memref<1x8x1024xf32, #tpu.memory_space<vmem>>, vector<1x8x1024xf32>
    %21 = vector.shape_cast %20 : vector<1x8x1024xf32> to vector<8x1024xf32>
    %22 = vector.shape_cast %19 : vector<8x1024xf32> to vector<1x8x1024xf32>
    tpu.vector_store %arg4[%c0_17, %c0_18, %c0_19], %22 {strides = array<i32>} : memref<1x8x1024xf32, #tpu.memory_space<vmem>>, vector<1x8x1024xf32>,
    return
  }
  func.func @transform_0(%arg0: i32) -> (i32, i32, i32) {
    %c0_i32 = arith.constant 0 : i32
    %c0_i32_0 = arith.constant 0 : i32
    %c0_i32_1 = arith.constant 0 : i32
    return %arg0, %c0_i32, %c0_i32_0 : i32, i32, i32
  }
  func.func @transform_1(%arg0: i32) -> (i32, i32, i32) {
    %c0_i32 = arith.constant 0 : i32
    %c0_i32_0 = arith.constant 0 : i32
    %c0_i32_1 = arith.constant 0 : i32
    %c0_i32_2 = arith.constant 0 : i32
    return %c0_i32, %c0_i32_0, %c0_i32_1 : i32, i32, i32
  }
  func.func @transform_2(%arg0: i32) -> (i32, i32) {
    %c0_i32 = arith.constant 0 : i32
    %c0_i32_0 = arith.constant 0 : i32
    %c0_i32_1 = arith.constant 0 : i32
    return %c0_i32, %c0_i32_0 : i32, i32
  }
  func.func @transform_3(%arg0: i32) -> (i32, i32, i32) {
    %c0_i32 = arith.constant 0 : i32
    %c0_i32_0 = arith.constant 0 : i32
    %c0_i32_1 = arith.constant 0 : i32
    return %arg0, %c0_i32, %c0_i32_0 : i32, i32, i32
  }
}

</mosaic_0001>

<llo_original>
// kernel: upscale_block_apply.1
$region0: #{upscale_block_apply.1}
  #allocation0 [shape = 'u32[]', space=smem, size = 0x4, offset = 0x4, fixed_abs, tag = 'smem constant byte address 0x4 - core index']
  #allocation1 [shape = 'u32[144,128]{1,0:T(1,128)}', space=vmem, size = 0x12000, scoped, tag = 'internal scratch']
  %s0 = inlined_call_operand.vmem [shape: f32[2,12,1088], index: 0, kind: input, shape index: {}]
  %s1 = inlined_call_operand.vmem [shape: f32[3,8,12], index: 1, kind: input, shape index: {}]
  %s2 = inlined_call_operand.vmem [shape: f32[8,1], index: 2, kind: input, shape index: {}]
  %s3 = inlined_call_operand.vmem [shape: f32[2,8,1024], index: 3, kind: output, shape index: {}]
  %s4 = sld [smem:[#allocation0]]
  $region45: #{upscale_block_apply.1} parent=0
    _
  %s6 = ssub.s32 1, %s4
  %s7 = scalar_select 0, %s6, %s4
  loop: start=0, step=1, limit=4
  $region2: #{upscale_block_apply.1} parent=0 // loop_pre_header
    _
  $region3: #{upscale_block_apply.1} parent=0 // loop_header
    %s9 = sphi 0, %s13
    %p10 = scmp.ge.s32.totalorder %s9, 4
    %s19 = sphi 0, %s21
    %s22 = sphi 0, %s19
    %s23 = sphi 0, %s22
    %s39 = sphi 0, %s23
    %s43 = sphi 0, %s43
    %s45 = sphi 0, %s43
    %s46 = sphi 0, %s45
    %s60 = sphi 0, %s46
    %s64 = sphi 0, %s64
    %s66 = sphi 0, %s64
    %s67 = sphi 0, %s66
    %s81 = sphi 0, %s67
    %s87 = sphi 0, %s89
    %s90 = sphi 0, %s87
    %s91 = sphi 0, %s90
    %s107 = sphi 0, %s91
  $region4: #{upscale_block_apply.1} parent=0 // loop_header_branch
    %12 = sbr.rel (%p10) target = $region8
  $region5: #{upscale_block_apply.1} parent=0 // loop_body
    %s14 = ssub.s32 %s9, 1
    %s15 = ssub.s32 %s9, 2
    %s16 = sadd.s32 %s9, 1
    %s17 = ssub.s32 %s9, %s16
    %p18 = scmp.eq.s32.totalorder %s17, 0
    %s20 = sadd.s32 %s19, 1
    %s21 = scalar_select %p18, %s19, %s20
    %p24 = pneg %p18
    %p25 = scmp.eq.s32.totalorder %s9, 1
    %p26 = por %p24, %p25
    %p27 = scmp.ne.s32.totalorder %s19, %s22
    %p28 = scmp.eq.s32.totalorder %s9, 0
    %p29 = por %p27, %p28
    %p30 = scmp.ne.s32.totalorder %s19, %s22
    %p31 = scmp.eq.s32.totalorder %s14, 1
    %p32 = por %p30, %p31
    %p33 = scmp.ne.s32.totalorder %s22, %s23
    %p34 = scmp.eq.s32.totalorder %s14, 0
    %p35 = por %p33, %p34
    %p36 = scmp.ne.s32.totalorder %s22, %s23
    %p37 = scmp.eq.s32.totalorder %s15, 1
    %p38 = por %p36, %p37
    %p40 = scmp.ne.s32.totalorder %s23, %s39
    %p41 = scmp.eq.s32.totalorder %s15, 0
    %p42 = por %p40, %p41
    %s44 = sadd.s32 %s43, 1
    %p47 = scmp.eq.s32.totalorder %s9, 1
    %p48 = scmp.ne.s32.totalorder %s43, %s45
    %p49 = scmp.eq.s32.totalorder %s9, 0
    %p50 = por %p48, %p49
    %p51 = scmp.ne.s32.totalorder %s43, %s45
    %p52 = scmp.eq.s32.totalorder %s14, 1
    %p53 = por %p51, %p52
    %p54 = scmp.ne.s32.totalorder %s45, %s46
    %p55 = scmp.eq.s32.totalorder %s14, 0
    %p56 = por %p54, %p55
    %p57 = scmp.ne.s32.totalorder %s45, %s46
    %p58 = scmp.eq.s32.totalorder %s15, 1
    %p59 = por %p57, %p58
    %p61 = scmp.ne.s32.totalorder %s46, %s60
    %p62 = scmp.eq.s32.totalorder %s15, 0
    %p63 = por %p61, %p62
    %s65 = sadd.s32 %s64, 1
    %p68 = scmp.eq.s32.totalorder %s9, 1
    %p69 = scmp.ne.s32.totalorder %s64, %s66
    %p70 = scmp.eq.s32.totalorder %s9, 0
    %p71 = por %p69, %p70
    %p72 = scmp.ne.s32.totalorder %s64, %s66
    %p73 = scmp.eq.s32.totalorder %s14, 1
    %p74 = por %p72, %p73
    %p75 = scmp.ne.s32.totalorder %s66, %s67
    %p76 = scmp.eq.s32.totalorder %s14, 0
    %p77 = por %p75, %p76
    %p78 = scmp.ne.s32.totalorder %s66, %s67
    %p79 = scmp.eq.s32.totalorder %s15, 1
    %p80 = por %p78, %p79
    %p82 = scmp.ne.s32.totalorder %s67, %s81
    %p83 = scmp.eq.s32.totalorder %s15, 0
    %p84 = por %p82, %p83
    %s85 = ssub.s32 %s9, %s16
    %p86 = scmp.eq.s32.totalorder %s85, 0
    %s88 = sadd.s32 %s87, 1
    %s89 = scalar_select %p86, %s87, %s88
    %p92 = pneg %p86
    %p93 = scmp.eq.s32.totalorder %s9, 1
    %p94 = por %p92, %p93
    %p95 = scmp.ne.s32.totalorder %s87, %s90
    %p96 = scmp.eq.s32.totalorder %s9, 0
    %p97 = por %p95, %p96
    %p98 = scmp.ne.s32.totalorder %s87, %s90
    %p99 = scmp.eq.s32.totalorder %s14, 1
    %p100 = por %p98, %p99
    %p101 = scmp.ne.s32.totalorder %s90, %s91
    %p102 = scmp.eq.s32.totalorder %s14, 0
    %p103 = por %p101, %p102
    %p104 = scmp.ne.s32.totalorder %s90, %s91
    %p105 = scmp.eq.s32.totalorder %s15, 1
    %p106 = por %p104, %p105
    %p108 = scmp.ne.s32.totalorder %s91, %s107
    %p109 = scmp.eq.s32.totalorder %s15, 0
    %p110 = por %p108, %p109
    %p111 = scmp.le.s32.totalorder 1, %s9
    %p112 = scmp.lt.s32.totalorder %s9, 3
    %p113 = pnand %p111, %p112
    %p114 = pneg %p113
    // Predicated region
    $region9: #{upscale_block_apply.1} parent=5 // pred_check
      _
    $region10: #{upscale_block_apply.1} parent=5 // pred_check_branch
      %116 = sbr.rel (%p113) target = $region12
    $region11: #{upscale_block_apply.1} parent=5 // pred_region
      %s117 = ssub.s32 %s9, 1
      // Predicated region
      $region13: #{upscale_block_apply.1} parent=11 // pred_check
        %p118 = pneg %p56
      $region14: #{upscale_block_apply.1} parent=11 // pred_check_branch
        %120 = sbr.rel (%p118) target = $region16
      $region15: #{upscale_block_apply.1} parent=11 // pred_region
        _
      $region16: #{upscale_block_apply.1} parent=11 // pred_fallthru
        _
      // Predicated region
      $region17: #{upscale_block_apply.1} parent=11 // pred_check
        %p121 = pneg %p77
      $region18: #{upscale_block_apply.1} parent=11 // pred_check_branch
        %123 = sbr.rel (%p121) target = $region20
      $region19: #{upscale_block_apply.1} parent=11 // pred_region
        _
      $region20: #{upscale_block_apply.1} parent=11 // pred_fallthru
        _
    $region12: #{upscale_block_apply.1} parent=5 // pred_fallthru
      _
    %p124 = scmp.lt.s32.totalorder %s9, 2
    // Predicated region
    $region21: #{upscale_block_apply.1} parent=5 // pred_check
      %p125 = pneg %p124
    $region22: #{upscale_block_apply.1} parent=5 // pred_check_branch
      %127 = sbr.rel (%p125) target = $region24
    $region23: #{upscale_block_apply.1} parent=5 // pred_region
      // Predicated region
      $region25: #{upscale_block_apply.1} parent=23 // pred_check
        %p128 = pneg %p29
      $region26: #{upscale_block_apply.1} parent=23 // pred_check_branch
        %130 = sbr.rel (%p128) target = $region28
      $region27: #{upscale_block_apply.1} parent=23 // pred_region
        %p131 = scmp.lt.s32.totalorder %s9, 1
        %s132 = scalar_select %p131, %s9, 1
        %s133 = smul.addr %s132, 18
        %s134 = smul.addr %s133, 8
        %s135 = scalar_lea.vmem %s0, %s134
      $region28: #{upscale_block_apply.1} parent=23 // pred_fallthru
        _
    $region24: #{upscale_block_apply.1} parent=5 // pred_fallthru
      _
    %p136 = scmp.le.s32.totalorder 1, %s9
    %p137 = scmp.lt.s32.totalorder %s9, 3
    %p138 = pnand %p136, %p137
    %p139 = pneg %p138
    // Predicated region
    $region29: #{upscale_block_apply.1} parent=5 // pred_check
      _
    $region30: #{upscale_block_apply.1} parent=5 // pred_check_branch
      %141 = sbr.rel (%p138) target = $region32
    $region31: #{upscale_block_apply.1} parent=5 // pred_region
      %s142 = ssub.s32 %s9, 1
      %p143 = scmp.lt.s32.totalorder %s14, 1
      %s144 = scalar_select %p143, %s14, 1
      %s145 = smul.addr %s144, 18
      %s146 = smul.addr %s145, 8
      %s147 = scalar_lea.vmem %s0, %s146
      %p148 = pneg %p35
      %p149 = pneg %p32
      %p150 = pneg %p56
      %p151 = pneg %p53
      %p152 = pneg %p77
      %p153 = pneg %p74
      %p154 = pneg %p103
      %p155 = pneg %p100
      %p156 = scmp.lt.s32.totalorder %s14, 1
      %s157 = scalar_select %p156, %s14, 1
      %s158 = smul.addr %s157, 8
      %s159 = smul.addr %s158, 8
      %s160 = scalar_lea.vmem %s3, %s159
      %p161 = scmp.lt.s32.totalorder %s14, 1
      %s162 = scalar_select %p161, %s14, 1
      %s163 = smul.addr %s162, 18
      %s164 = smul.addr %s163, 8
      %s165 = scalar_lea.vmem %s0, %s164
      %p166 = scmp.lt.s32.totalorder %s14, 1
      %s167 = scalar_select %p166, %s14, 1
      %s168 = smul.addr %s167, 8
      %s169 = smul.addr %s168, 8
      %s170 = scalar_lea.vmem %s3, %s169
      %v171 = vld [vmem:[%s165] sm:$0xff]
      %v172 = vld [vmem:[%s165 + $0x8] sm:$0xff]
      %v173 = vld [vmem:[%s165 + $0x10] sm:$0xff]
      %v174 = vld [vmem:[%s165 + $0x18] sm:$0xff]
      %v175 = vld [vmem:[%s165 + $0x20] sm:$0xff]
      %v176 = vld [vmem:[%s165 + $0x28] sm:$0xff]
      %v177 = vld [vmem:[%s165 + $0x30] sm:$0xff]
      %v178 = vld [vmem:[%s165 + $0x38] sm:$0xff]
      %v179 = vld [vmem:[%s165 + $0x48] sm:$0xf]
      %v180 = vld [vmem:[%s165 + $0x50] sm:$0xf]
      %v181 = vld [vmem:[%s165 + $0x58] sm:$0xf]
      %v182 = vld [vmem:[%s165 + $0x60] sm:$0xf]
      %v183 = vld [vmem:[%s165 + $0x68] sm:$0xf]
      %v184 = vld [vmem:[%s165 + $0x70] sm:$0xf]
      %v185 = vld [vmem:[%s165 + $0x78] sm:$0xf]
      %v186 = vld [vmem:[%s165 + $0x80] sm:$0xf]
      %v187 = vld [vmem:[%s1] sm:$0xff]
      %v188 = vld [vmem:[%s165 + $0x40] sm:$0xff]
      %v189 = vld [vmem:[%s165 + $0x88] sm:$0xf]
      %s190 = scalar_lea.vmem %s1, 8
      %v191 = vld [vmem:[%s190] sm:$0xff]
      %210 = vrot.lane.b32.xlu0 %v171, 96
      %v211 = vpop.permute.xlu0 %210
      %212 = vrot.lane.b32.xlu0 %v172, 96
      %v213 = vpop.permute.xlu0 %212
      %214 = vrot.lane.b32.xlu0 %v173, 96
      %v215 = vpop.permute.xlu0 %214
      %216 = vrot.lane.b32.xlu0 %v174, 96
      %v217 = vpop.permute.xlu0 %216
      %218 = vrot.lane.b32.xlu0 %v175, 96
      %v219 = vpop.permute.xlu0 %218
      %220 = vrot.lane.b32.xlu0 %v176, 96
      %v221 = vpop.permute.xlu0 %220
      %222 = vrot.lane.b32.xlu0 %v177, 96
      %v223 = vpop.permute.xlu0 %222
      %224 = vrot.lane.b32.xlu0 %v178, 96
      %v225 = vpop.permute.xlu0 %224
      %226 = vrot.lane.b32.xlu0 %v188, 96
      %v227 = vpop.permute.xlu0 %226
      %228 = vrot.lane.b32.xlu0 %v179, 96
      %v229 = vpop.permute.xlu0 %228
      %230 = vrot.lane.b32.xlu0 %v180, 96
      %v231 = vpop.permute.xlu0 %230
      %232 = vrot.lane.b32.xlu0 %v181, 96
      %v233 = vpop.permute.xlu0 %232
      %234 = vrot.lane.b32.xlu0 %v182, 96
      %v235 = vpop.permute.xlu0 %234
      %236 = vrot.lane.b32.xlu0 %v183, 96
      %v237 = vpop.permute.xlu0 %236
      %238 = vrot.lane.b32.xlu0 %v184, 96
      %v239 = vpop.permute.xlu0 %238
      %240 = vrot.lane.b32.xlu0 %v185, 96
      %v241 = vpop.permute.xlu0 %240
      %242 = vrot.lane.b32.xlu0 %v186, 96
      %v243 = vpop.permute.xlu0 %242
      %244 = vrot.lane.b32.xlu0 %v189, 96
      %v245 = vpop.permute.xlu0 %244
      %vm246 = vcmask 785408
      %v247 = vsel %vm246, %v211, %v213
      %v248 = vsel %vm246, %v213, %v215
      %v249 = vsel %vm246, %v215, %v217
      %v250 = vsel %vm246, %v217, %v219
      %v251 = vsel %vm246, %v219, %v221
      %v252 = vsel %vm246, %v221, %v223
      %v253 = vsel %vm246, %v223, %v225
      %v254 = vsel %vm246, %v225, %v227
      %v255 = vsel %vm246, %v229, %v231
      %v256 = vsel %vm246, %v231, %v233
      %v257 = vsel %vm246, %v233, %v235
      %v258 = vsel %vm246, %v235, %v237
      %v259 = vsel %vm246, %v237, %v239
      %v260 = vsel %vm246, %v239, %v241
      %v261 = vsel %vm246, %v241, %v243
      %v262 = vsel %vm246, %v243, %v245
      %vm271 = vcmask 97280
      %v273 = vsel %vm271, %v191, 0
      %vm275 = vcmask 1043456
      %v276 = vsel %vm275, %v255, 0
      %v278 = vsel %vm275, %v256, 0
      %v280 = vsel %vm275, %v257, 0
      %v282 = vsel %vm275, %v258, 0
      %v284 = vsel %vm275, %v259, 0
      %v286 = vsel %vm275, %v260, 0
      %v288 = vsel %vm275, %v261, 0
      %v290 = vsel %vm275, %v262, 0
      %292 = vmatprep.subr.mxu0 0.0
      %293 = vmatpush1.msra.mxu0 0.0
      %294 = vmatprep.subr.mxu0 0.0
      %295 = vmatpush1.msra.mxu0 0.0
      %296 = vmatprep.subr.mxu0 0.0
      %297 = vmatpush1.msra.mxu0 0.0
      %298 = vmatprep.subr.mxu0 0.0
      %299 = vmatpush1.msra.mxu0 0.0
      %300 = vmatprep.subr.mxu0 0.0
      %301 = vmatpush1.msra.mxu0 0.0
      %302 = vmatprep.subr.mxu0 0.0
      %303 = vmatpush1.msra.mxu0 0.0
      %304 = vmatprep.subr.mxu0 0.0
      %305 = vmatpush1.msra.mxu0 0.0
      %306 = vmatprep.subr.mxu0 0.0
      %307 = vmatpush1.msra.mxu0 0.0
      %308 = vmatprep.subr.mxu0 0.0
      %309 = vmatpush1.msra.mxu0 0.0
      %310 = vmatprep.subr.mxu0 0.0
      %311 = vmatpush1.msra.mxu0 0.0
      %312 = vmatprep.subr.mxu0 0.0
      %313 = vmatpush1.msra.mxu0 0.0
      %314 = vmatprep.subr.mxu0 0.0
      %315 = vmatpush1.msra.mxu0 0.0
      %316 = vmatprep.subr.mxu0 0.0
      %317 = vmatpush1.msra.mxu0 0.0
      %318 = vmatprep.subr.mxu0 0.0
      %319 = vmatpush1.msra.mxu0 0.0
      %320 = vmatprep.subr.mxu0 %v278
      %321 = vmatpush1.msra.mxu0 %v276
      %322 = vmatprep.subr.mxu0 %v248
      %323 = vmatpush1.msra.mxu0 %v247
      %324 = vmatprep.subr.mxu0 0.0
      %325 = vmatpush2.msra.mxu0 0.0
      %326 = vmatprep.subr.mxu0 0.0
      %327 = vmatpush2.msra.mxu0 0.0
      %328 = vmatprep.subr.mxu0 0.0
      %329 = vmatpush2.msra.mxu0 0.0
      %330 = vmatprep.subr.mxu0 0.0
      %331 = vmatpush2.msra.mxu0 0.0
      %332 = vmatprep.subr.mxu0 0.0
      %333 = vmatpush2.msra.mxu0 0.0
      %334 = vmatprep.subr.mxu0 0.0
      %335 = vmatpush2.msra.mxu0 0.0
      %336 = vmatprep.subr.mxu0 0.0
      %337 = vmatpush2.msra.mxu0 0.0
      %338 = vmatprep.subr.mxu0 0.0
      %339 = vmatpush2.msra.mxu0 0.0
      %340 = vmatprep.subr.mxu0 0.0
      %341 = vmatpush2.msra.mxu0 0.0
      %342 = vmatprep.subr.mxu0 0.0
      %343 = vmatpush2.msra.mxu0 0.0
      %344 = vmatprep.subr.mxu0 0.0
      %345 = vmatpush2.msra.mxu0 0.0
      %346 = vmatprep.subr.mxu0 0.0
      %347 = vmatpush2.msra.mxu0 0.0
      %348 = vmatprep.subr.mxu0 0.0
      %349 = vmatpush2.msra.mxu0 0.0
      %350 = vmatprep.subr.mxu0 0.0
      %351 = vmatpush2.msra.mxu0 0.0
      %352 = vmatprep.subr.mxu0 0.0
      %353 = vmatpush2.msra.mxu0 0.0
      %354 = vmatprep.subr.mxu0 0.0
      %355 = vmatpush2.msra.mxu0 0.0
      %356 = vmatprep.mubr.f32.mxu0 0.0
      %357 = vmatmul.mubr.f32.gmra.mxu0 %v273
      %v358 = vpop.f32.mrf.mxu0
      %v359 = vadd.f32 0.0, %v358
      %v360 = vpop.f32.mrf.mxu0
      %v361 = vadd.f32 0.0, %v360
      %362 = vdwg.mxu0
      %363 = vmatprep.subr.mxu0 0.0
      %364 = vmatpush1.msra.mxu0 0.0
      %365 = vmatprep.subr.mxu0 0.0
      %366 = vmatpush1.msra.mxu0 0.0
      %367 = vmatprep.subr.mxu0 0.0
      %368 = vmatpush1.msra.mxu0 0.0
      %369 = vmatprep.subr.mxu0 0.0
      %370 = vmatpush1.msra.mxu0 0.0
      %371 = vmatprep.subr.mxu0 0.0
      %372 = vmatpush1.msra.mxu0 0.0
      %373 = vmatprep.subr.mxu0 0.0
      %374 = vmatpush1.msra.mxu0 0.0
      %375 = vmatprep.subr.mxu0 0.0
      %376 = vmatpush1.msra.mxu0 0.0
      %377 = vmatprep.subr.mxu0 0.0
      %378 = vmatpush1.msra.mxu0 0.0
      %379 = vmatprep.subr.mxu0 0.0
      %380 = vmatpush1.msra.mxu0 0.0
      %381 = vmatprep.subr.mxu0 0.0
      %382 = vmatpush1.msra.mxu0 0.0
      %383 = vmatprep.subr.mxu0 0.0
      %384 = vmatpush1.msra.mxu0 0.0
      %385 = vmatprep.subr.mxu0 0.0
      %386 = vmatpush1.msra.mxu0 0.0
      %387 = vmatprep.subr.mxu0 0.0
      %388 = vmatpush1.msra.mxu0 0.0
      %389 = vmatprep.subr.mxu0 0.0
      %390 = vmatpush1.msra.mxu0 0.0
      %391 = vmatprep.subr.mxu0 %v282
      %392 = vmatpush1.msra.mxu0 %v280
      %393 = vmatprep.subr.mxu0 %v250
      %394 = vmatpush1.msra.mxu0 %v249
      %395 = vmatprep.subr.mxu0 0.0
      %396 = vmatpush2.msra.mxu0 0.0
      %397 = vmatprep.subr.mxu0 0.0
      %398 = vmatpush2.msra.mxu0 0.0
      %399 = vmatprep.subr.mxu0 0.0
      %400 = vmatpush2.msra.mxu0 0.0
      %401 = vmatprep.subr.mxu0 0.0
      %402 = vmatpush2.msra.mxu0 0.0
      %403 = vmatprep.subr.mxu0 0.0
      %404 = vmatpush2.msra.mxu0 0.0
      %405 = vmatprep.subr.mxu0 0.0
      %406 = vmatpush2.msra.mxu0 0.0
      %407 = vmatprep.subr.mxu0 0.0
      %408 = vmatpush2.msra.mxu0 0.0
      %409 = vmatprep.subr.mxu0 0.0
      %410 = vmatpush2.msra.mxu0 0.0
      %411 = vmatprep.subr.mxu0 0.0
      %412 = vmatpush2.msra.mxu0 0.0
      %413 = vmatprep.subr.mxu0 0.0
      %414 = vmatpush2.msra.mxu0 0.0
      %415 = vmatprep.subr.mxu0 0.0
      %416 = vmatpush2.msra.mxu0 0.0
      %417 = vmatprep.subr.mxu0 0.0
      %418 = vmatpush2.msra.mxu0 0.0
      %419 = vmatprep.subr.mxu0 0.0
      %420 = vmatpush2.msra.mxu0 0.0
      %421 = vmatprep.subr.mxu0 0.0
      %422 = vmatpush2.msra.mxu0 0.0
      %423 = vmatprep.subr.mxu0 0.0
      %424 = vmatpush2.msra.mxu0 0.0
      %425 = vmatprep.subr.mxu0 0.0
      %426 = vmatpush2.msra.mxu0 0.0
      %427 = vmatprep.mubr.f32.mxu0 0.0
      %428 = vmatmul.mubr.f32.gmra.mxu0 %v273
      %v429 = vpop.f32.mrf.mxu0
      %v430 = vadd.f32 0.0, %v429
      %v431 = vpop.f32.mrf.mxu0
      %v432 = vadd.f32 0.0, %v431
      %433 = vdwg.mxu0
      %434 = vmatprep.subr.mxu0 0.0
      %435 = vmatpush1.msra.mxu0 0.0
      %436 = vmatprep.subr.mxu0 0.0
      %437 = vmatpush1.msra.mxu0 0.0
      %438 = vmatprep.subr.mxu0 0.0
      %439 = vmatpush1.msra.mxu0 0.0
      %440 = vmatprep.subr.mxu0 0.0
      %441 = vmatpush1.msra.mxu0 0.0
      %442 = vmatprep.subr.mxu0 0.0
      %443 = vmatpush1.msra.mxu0 0.0
      %444 = vmatprep.subr.mxu0 0.0
      %445 = vmatpush1.msra.mxu0 0.0
      %446 = vmatprep.subr.mxu0 0.0
      %447 = vmatpush1.msra.mxu0 0.0
      %448 = vmatprep.subr.mxu0 0.0
      %449 = vmatpush1.msra.mxu0 0.0
      %450 = vmatprep.subr.mxu0 0.0
      %451 = vmatpush1.msra.mxu0 0.0
      %452 = vmatprep.subr.mxu0 0.0
      %453 = vmatpush1.msra.mxu0 0.0
      %454 = vmatprep.subr.mxu0 0.0
      %455 = vmatpush1.msra.mxu0 0.0
      %456 = vmatprep.subr.mxu0 0.0
      %457 = vmatpush1.msra.mxu0 0.0
      %458 = vmatprep.subr.mxu0 0.0
      %459 = vmatpush1.msra.mxu0 0.0
      %460 = vmatprep.subr.mxu0 0.0
      %461 = vmatpush1.msra.mxu0 0.0
      %462 = vmatprep.subr.mxu0 %v286
      %463 = vmatpush1.msra.mxu0 %v284
      %464 = vmatprep.subr.mxu0 %v252
      %465 = vmatpush1.msra.mxu0 %v251
      %466 = vmatprep.subr.mxu0 0.0
      %467 = vmatpush2.msra.mxu0 0.0
      %468 = vmatprep.subr.mxu0 0.0
      %469 = vmatpush2.msra.mxu0 0.0
      %470 = vmatprep.subr.mxu0 0.0
      %471 = vmatpush2.msra.mxu0 0.0
      %472 = vmatprep.subr.mxu0 0.0
      %473 = vmatpush2.msra.mxu0 0.0
      %474 = vmatprep.subr.mxu0 0.0
      %475 = vmatpush2.msra.mxu0 0.0
      %476 = vmatprep.subr.mxu0 0.0
      %477 = vmatpush2.msra.mxu0 0.0
      %478 = vmatprep.subr.mxu0 0.0
      %479 = vmatpush2.msra.mxu0 0.0
      %480 = vmatprep.subr.mxu0 0.0
      %481 = vmatpush2.msra.mxu0 0.0
      %482 = vmatprep.subr.mxu0 0.0
      %483 = vmatpush2.msra.mxu0 0.0
      %484 = vmatprep.subr.mxu0 0.0
      %485 = vmatpush2.msra.mxu0 0.0
      %486 = vmatprep.subr.mxu0 0.0
      %487 = vmatpush2.msra.mxu0 0.0
      %488 = vmatprep.subr.mxu0 0.0
      %489 = vmatpush2.msra.mxu0 0.0
      %490 = vmatprep.subr.mxu0 0.0
      %491 = vmatpush2.msra.mxu0 0.0
      %492 = vmatprep.subr.mxu0 0.0
      %493 = vmatpush2.msra.mxu0 0.0
      %494 = vmatprep.subr.mxu0 0.0
      %495 = vmatpush2.msra.mxu0 0.0
      %496 = vmatprep.subr.mxu0 0.0
      %497 = vmatpush2.msra.mxu0 0.0
      %498 = vmatprep.mubr.f32.mxu0 0.0
      %499 = vmatmul.mubr.f32.gmra.mxu0 %v273
      %v500 = vpop.f32.mrf.mxu0
      %v501 = vadd.f32 0.0, %v500
      %v502 = vpop.f32.mrf.mxu0
      %v503 = vadd.f32 0.0, %v502
      %504 = vdwg.mxu0
      %505 = vmatprep.subr.mxu0 0.0
      %506 = vmatpush1.msra.mxu0 0.0
      %507 = vmatprep.subr.mxu0 0.0
      %508 = vmatpush1.msra.mxu0 0.0
      %509 = vmatprep.subr.mxu0 0.0
      %510 = vmatpush1.msra.mxu0 0.0
      %511 = vmatprep.subr.mxu0 0.0
      %512 = vmatpush1.msra.mxu0 0.0
      %513 = vmatprep.subr.mxu0 0.0
      %514 = vmatpush1.msra.mxu0 0.0
      %515 = vmatprep.subr.mxu0 0.0
      %516 = vmatpush1.msra.mxu0 0.0
      %517 = vmatprep.subr.mxu0 0.0
      %518 = vmatpush1.msra.mxu0 0.0
      %519 = vmatprep.subr.mxu0 0.0
      %520 = vmatpush1.msra.mxu0 0.0
      %521 = vmatprep.subr.mxu0 0.0
      %522 = vmatpush1.msra.mxu0 0.0
      %523 = vmatprep.subr.mxu0 0.0
      %524 = vmatpush1.msra.mxu0 0.0
      %525 = vmatprep.subr.mxu0 0.0
      %526 = vmatpush1.msra.mxu0 0.0
      %527 = vmatprep.subr.mxu0 0.0
      %528 = vmatpush1.msra.mxu0 0.0
      %529 = vmatprep.subr.mxu0 0.0
      %530 = vmatpush1.msra.mxu0 0.0
      %531 = vmatprep.subr.mxu0 0.0
      %532 = vmatpush1.msra.mxu0 0.0
      %533 = vmatprep.subr.mxu0 %v290
      %534 = vmatpush1.msra.mxu0 %v288
      %535 = vmatprep.subr.mxu0 %v254
      %536 = vmatpush1.msra.mxu0 %v253
      %537 = vmatprep.subr.mxu0 0.0
      %538 = vmatpush2.msra.mxu0 0.0
      %539 = vmatprep.subr.mxu0 0.0
      %540 = vmatpush2.msra.mxu0 0.0
      %541 = vmatprep.subr.mxu0 0.0
      %542 = vmatpush2.msra.mxu0 0.0
      %543 = vmatprep.subr.mxu0 0.0
      %544 = vmatpush2.msra.mxu0 0.0
      %545 = vmatprep.subr.mxu0 0.0
      %546 = vmatpush2.msra.mxu0 0.0
      %547 = vmatprep.subr.mxu0 0.0
      %548 = vmatpush2.msra.mxu0 0.0
      %549 = vmatprep.subr.mxu0 0.0
      %550 = vmatpush2.msra.mxu0 0.0
      %551 = vmatprep.subr.mxu0 0.0
      %552 = vmatpush2.msra.mxu0 0.0
      %553 = vmatprep.subr.mxu0 0.0
      %554 = vmatpush2.msra.mxu0 0.0
      %555 = vmatprep.subr.mxu0 0.0
      %556 = vmatpush2.msra.mxu0 0.0
      %557 = vmatprep.subr.mxu0 0.0
      %558 = vmatpush2.msra.mxu0 0.0
      %559 = vmatprep.subr.mxu0 0.0
      %560 = vmatpush2.msra.mxu0 0.0
      %561 = vmatprep.subr.mxu0 0.0
      %562 = vmatpush2.msra.mxu0 0.0
      %563 = vmatprep.subr.mxu0 0.0
      %564 = vmatpush2.msra.mxu0 0.0
      %565 = vmatprep.subr.mxu0 0.0
      %566 = vmatpush2.msra.mxu0 0.0
      %567 = vmatprep.subr.mxu0 0.0
      %568 = vmatpush2.msra.mxu0 0.0
      %569 = vmatprep.mubr.f32.mxu0 0.0
      %570 = vmatmul.mubr.f32.gmra.mxu0 %v273
      %v571 = vpop.f32.mrf.mxu0
      %v572 = vadd.f32 0.0, %v571
      %v573 = vpop.f32.mrf.mxu0
      %v574 = vadd.f32 0.0, %v573
      %575 = vdwg.mxu0
      %v577 = vsel %vm271, %v187, 0
      %v579 = vsel %vm275, %v179, 0
      %v581 = vsel %vm275, %v180, 0
      %v583 = vsel %vm275, %v181, 0
      %v585 = vsel %vm275, %v182, 0
      %v587 = vsel %vm275, %v183, 0
      %v589 = vsel %vm275, %v184, 0
      %v591 = vsel %vm275, %v185, 0
      %v593 = vsel %vm275, %v186, 0
      %595 = vmatprep.subr.mxu0 0.0
      %596 = vmatpush1.msra.mxu0 0.0
      %597 = vmatprep.subr.mxu0 0.0
      %598 = vmatpush1.msra.mxu0 0.0
      %599 = vmatprep.subr.mxu0 0.0
      %600 = vmatpush1.msra.mxu0 0.0
      %601 = vmatprep.subr.mxu0 0.0
      %602 = vmatpush1.msra.mxu0 0.0
      %603 = vmatprep.subr.mxu0 0.0
      %604 = vmatpush1.msra.mxu0 0.0
      %605 = vmatprep.subr.mxu0 0.0
      %606 = vmatpush1.msra.mxu0 0.0
      %607 = vmatprep.subr.mxu0 0.0
      %608 = vmatpush1.msra.mxu0 0.0
      %609 = vmatprep.subr.mxu0 0.0
      %610 = vmatpush1.msra.mxu0 0.0
      %611 = vmatprep.subr.mxu0 0.0
      %612 = vmatpush1.msra.mxu0 0.0
      %613 = vmatprep.subr.mxu0 0.0
      %614 = vmatpush1.msra.mxu0 0.0
      %615 = vmatprep.subr.mxu0 0.0
      %616 = vmatpush1.msra.mxu0 0.0
      %617 = vmatprep.subr.mxu0 0.0
      %618 = vmatpush1.msra.mxu0 0.0
      %619 = vmatprep.subr.mxu0 0.0
      %620 = vmatpush1.msra.mxu0 0.0
      %621 = vmatprep.subr.mxu0 0.0
      %622 = vmatpush1.msra.mxu0 0.0
      %623 = vmatprep.subr.mxu0 %v581
      %624 = vmatpush1.msra.mxu0 %v579
      %625 = vmatprep.subr.mxu0 %v172
      %626 = vmatpush1.msra.mxu0 %v171
      %627 = vmatprep.subr.mxu0 0.0
      %628 = vmatpush2.msra.mxu0 0.0
      %629 = vmatprep.subr.mxu0 0.0
      %630 = vmatpush2.msra.mxu0 0.0
      %631 = vmatprep.subr.mxu0 0.0
      %632 = vmatpush2.msra.mxu0 0.0
      %633 = vmatprep.subr.mxu0 0.0
      %634 = vmatpush2.msra.mxu0 0.0
      %635 = vmatprep.subr.mxu0 0.0
      %636 = vmatpush2.msra.mxu0 0.0
      %637 = vmatprep.subr.mxu0 0.0
      %638 = vmatpush2.msra.mxu0 0.0
      %639 = vmatprep.subr.mxu0 0.0
      %640 = vmatpush2.msra.mxu0 0.0
      %641 = vmatprep.subr.mxu0 0.0
      %642 = vmatpush2.msra.mxu0 0.0
      %643 = vmatprep.subr.mxu0 0.0
      %644 = vmatpush2.msra.mxu0 0.0
      %645 = vmatprep.subr.mxu0 0.0
      %646 = vmatpush2.msra.mxu0 0.0
      %647 = vmatprep.subr.mxu0 0.0
      %648 = vmatpush2.msra.mxu0 0.0
      %649 = vmatprep.subr.mxu0 0.0
      %650 = vmatpush2.msra.mxu0 0.0
      %651 = vmatprep.subr.mxu0 0.0
      %652 = vmatpush2.msra.mxu0 0.0
      %653 = vmatprep.subr.mxu0 0.0
      %654 = vmatpush2.msra.mxu0 0.0
      %655 = vmatprep.subr.mxu0 0.0
      %656 = vmatpush2.msra.mxu0 0.0
      %657 = vmatprep.subr.mxu0 0.0
      %658 = vmatpush2.msra.mxu0 0.0
      %659 = vmatprep.mubr.f32.mxu0 0.0
      %660 = vmatmul.mubr.f32.gmra.mxu0 %v577
      %v661 = vpop.f32.mrf.mxu0
      %v662 = vadd.f32 %v359, %v661
      %v663 = vpop.f32.mrf.mxu0
      %v664 = vadd.f32 %v361, %v663
      %665 = vdwg.mxu0
      %666 = vmatprep.subr.mxu0 0.0
      %667 = vmatpush1.msra.mxu0 0.0
      %668 = vmatprep.subr.mxu0 0.0
      %669 = vmatpush1.msra.mxu0 0.0
      %670 = vmatprep.subr.mxu0 0.0
      %671 = vmatpush1.msra.mxu0 0.0
      %672 = vmatprep.subr.mxu0 0.0
      %673 = vmatpush1.msra.mxu0 0.0
      %674 = vmatprep.subr.mxu0 0.0
      %675 = vmatpush1.msra.mxu0 0.0
      %676 = vmatprep.subr.mxu0 0.0
      %677 = vmatpush1.msra.mxu0 0.0
      %678 = vmatprep.subr.mxu0 0.0
      %679 = vmatpush1.msra.mxu0 0.0
      %680 = vmatprep.subr.mxu0 0.0
      %681 = vmatpush1.msra.mxu0 0.0
      %682 = vmatprep.subr.mxu0 0.0
      %683 = vmatpush1.msra.mxu0 0.0
      %684 = vmatprep.subr.mxu0 0.0
      %685 = vmatpush1.msra.mxu0 0.0
      %686 = vmatprep.subr.mxu0 0.0
      %687 = vmatpush1.msra.mxu0 0.0
      %688 = vmatprep.subr.mxu0 0.0
      %689 = vmatpush1.msra.mxu0 0.0
      %690 = vmatprep.subr.mxu0 0.0
      %691 = vmatpush1.msra.mxu0 0.0
      %692 = vmatprep.subr.mxu0 0.0
      %693 = vmatpush1.msra.mxu0 0.0
      %694 = vmatprep.subr.mxu0 %v585
      %695 = vmatpush1.msra.mxu0 %v583
      %696 = vmatprep.subr.mxu0 %v174
      %697 = vmatpush1.msra.mxu0 %v173
      %698 = vmatprep.subr.mxu0 0.0
      %699 = vmatpush2.msra.mxu0 0.0
      %700 = vmatprep.subr.mxu0 0.0
      %701 = vmatpush2.msra.mxu0 0.0
      %702 = vmatprep.subr.mxu0 0.0
      %703 = vmatpush2.msra.mxu0 0.0
      %704 = vmatprep.subr.mxu0 0.0
      %705 = vmatpush2.msra.mxu0 0.0
      %706 = vmatprep.subr.mxu0 0.0
      %707 = vmatpush2.msra.mxu0 0.0
      %708 = vmatprep.subr.mxu0 0.0
      %709 = vmatpush2.msra.mxu0 0.0
      %710 = vmatprep.subr.mxu0 0.0
      %711 = vmatpush2.msra.mxu0 0.0
      %712 = vmatprep.subr.mxu0 0.0
      %713 = vmatpush2.msra.mxu0 0.0
      %714 = vmatprep.subr.mxu0 0.0
      %715 = vmatpush2.msra.mxu0 0.0
      %716 = vmatprep.subr.mxu0 0.0
      %717 = vmatpush2.msra.mxu0 0.0
      %718 = vmatprep.subr.mxu0 0.0
      %719 = vmatpush2.msra.mxu0 0.0
      %720 = vmatprep.subr.mxu0 0.0
      %721 = vmatpush2.msra.mxu0 0.0
      %722 = vmatprep.subr.mxu0 0.0
      %723 = vmatpush2.msra.mxu0 0.0
      %724 = vmatprep.subr.mxu0 0.0
      %725 = vmatpush2.msra.mxu0 0.0
      %726 = vmatprep.subr.mxu0 0.0
      %727 = vmatpush2.msra.mxu0 0.0
      %728 = vmatprep.subr.mxu0 0.0
      %729 = vmatpush2.msra.mxu0 0.0
      %730 = vmatprep.mubr.f32.mxu0 0.0
      %731 = vmatmul.mubr.f32.gmra.mxu0 %v577
      %v732 = vpop.f32.mrf.mxu0
      %v733 = vadd.f32 %v430, %v732
      %v734 = vpop.f32.mrf.mxu0
      %v735 = vadd.f32 %v432, %v734
      %736 = vdwg.mxu0
      %737 = vmatprep.subr.mxu0 0.0
      %738 = vmatpush1.msra.mxu0 0.0
      %739 = vmatprep.subr.mxu0 0.0
      %740 = vmatpush1.msra.mxu0 0.0
      %741 = vmatprep.subr.mxu0 0.0
      %742 = vmatpush1.msra.mxu0 0.0
      %743 = vmatprep.subr.mxu0 0.0
      %744 = vmatpush1.msra.mxu0 0.0
      %745 = vmatprep.subr.mxu0 0.0
      %746 = vmatpush1.msra.mxu0 0.0
      %747 = vmatprep.subr.mxu0 0.0
      %748 = vmatpush1.msra.mxu0 0.0
      %749 = vmatprep.subr.mxu0 0.0
      %750 = vmatpush1.msra.mxu0 0.0
      %751 = vmatprep.subr.mxu0 0.0
      %752 = vmatpush1.msra.mxu0 0.0
      %753 = vmatprep.subr.mxu0 0.0
      %754 = vmatpush1.msra.mxu0 0.0
      %755 = vmatprep.subr.mxu0 0.0
      %756 = vmatpush1.msra.mxu0 0.0
      %757 = vmatprep.subr.mxu0 0.0
      %758 = vmatpush1.msra.mxu0 0.0
      %759 = vmatprep.subr.mxu0 0.0
      %760 = vmatpush1.msra.mxu0 0.0
      %761 = vmatprep.subr.mxu0 0.0
      %762 = vmatpush1.msra.mxu0 0.0
      %763 = vmatprep.subr.mxu0 0.0
      %764 = vmatpush1.msra.mxu0 0.0
      %765 = vmatprep.subr.mxu0 %v589
      %766 = vmatpush1.msra.mxu0 %v587
      %767 = vmatprep.subr.mxu0 %v176
      %768 = vmatpush1.msra.mxu0 %v175
      %769 = vmatprep.subr.mxu0 0.0
      %770 = vmatpush2.msra.mxu0 0.0
      %771 = vmatprep.subr.mxu0 0.0
      %772 = vmatpush2.msra.mxu0 0.0
      %773 = vmatprep.subr.mxu0 0.0
      %774 = vmatpush2.msra.mxu0 0.0
      %775 = vmatprep.subr.mxu0 0.0
      %776 = vmatpush2.msra.mxu0 0.0
      %777 = vmatprep.subr.mxu0 0.0
      %778 = vmatpush2.msra.mxu0 0.0
      %779 = vmatprep.subr.mxu0 0.0
      %780 = vmatpush2.msra.mxu0 0.0
      %781 = vmatprep.subr.mxu0 0.0
      %782 = vmatpush2.msra.mxu0 0.0
      %783 = vmatprep.subr.mxu0 0.0
      %784 = vmatpush2.msra.mxu0 0.0
      %785 = vmatprep.subr.mxu0 0.0
      %786 = vmatpush2.msra.mxu0 0.0
      %787 = vmatprep.subr.mxu0 0.0
      %788 = vmatpush2.msra.mxu0 0.0
      %789 = vmatprep.subr.mxu0 0.0
      %790 = vmatpush2.msra.mxu0 0.0
      %791 = vmatprep.subr.mxu0 0.0
      %792 = vmatpush2.msra.mxu0 0.0
      %793 = vmatprep.subr.mxu0 0.0
      %794 = vmatpush2.msra.mxu0 0.0
      %795 = vmatprep.subr.mxu0 0.0
      %796 = vmatpush2.msra.mxu0 0.0
      %797 = vmatprep.subr.mxu0 0.0
      %798 = vmatpush2.msra.mxu0 0.0
      %799 = vmatprep.subr.mxu0 0.0
      %800 = vmatpush2.msra.mxu0 0.0
      %801 = vmatprep.mubr.f32.mxu0 0.0
      %802 = vmatmul.mubr.f32.gmra.mxu0 %v577
      %v803 = vpop.f32.mrf.mxu0
      %v804 = vadd.f32 %v501, %v803
      %v805 = vpop.f32.mrf.mxu0
      %v806 = vadd.f32 %v503, %v805
      %807 = vdwg.mxu0
      %808 = vmatprep.subr.mxu0 0.0
      %809 = vmatpush1.msra.mxu0 0.0
      %810 = vmatprep.subr.mxu0 0.0
      %811 = vmatpush1.msra.mxu0 0.0
      %812 = vmatprep.subr.mxu0 0.0
      %813 = vmatpush1.msra.mxu0 0.0
      %814 = vmatprep.subr.mxu0 0.0
      %815 = vmatpush1.msra.mxu0 0.0
      %816 = vmatprep.subr.mxu0 0.0
      %817 = vmatpush1.msra.mxu0 0.0
      %818 = vmatprep.subr.mxu0 0.0
      %819 = vmatpush1.msra.mxu0 0.0
      %820 = vmatprep.subr.mxu0 0.0
      %821 = vmatpush1.msra.mxu0 0.0
      %822 = vmatprep.subr.mxu0 0.0
      %823 = vmatpush1.msra.mxu0 0.0
      %824 = vmatprep.subr.mxu0 0.0
      %825 = vmatpush1.msra.mxu0 0.0
      %826 = vmatprep.subr.mxu0 0.0
      %827 = vmatpush1.msra.mxu0 0.0
      %828 = vmatprep.subr.mxu0 0.0
      %829 = vmatpush1.msra.mxu0 0.0
      %830 = vmatprep.subr.mxu0 0.0
      %831 = vmatpush1.msra.mxu0 0.0
      %832 = vmatprep.subr.mxu0 0.0
      %833 = vmatpush1.msra.mxu0 0.0
      %834 = vmatprep.subr.mxu0 0.0
      %835 = vmatpush1.msra.mxu0 0.0
      %836 = vmatprep.subr.mxu0 %v593
      %837 = vmatpush1.msra.mxu0 %v591
      %838 = vmatprep.subr.mxu0 %v178
      %839 = vmatpush1.msra.mxu0 %v177
      %840 = vmatprep.subr.mxu0 0.0
      %841 = vmatpush2.msra.mxu0 0.0
      %842 = vmatprep.subr.mxu0 0.0
      %843 = vmatpush2.msra.mxu0 0.0
      %844 = vmatprep.subr.mxu0 0.0
      %845 = vmatpush2.msra.mxu0 0.0
      %846 = vmatprep.subr.mxu0 0.0
      %847 = vmatpush2.msra.mxu0 0.0
      %848 = vmatprep.subr.mxu0 0.0
      %849 = vmatpush2.msra.mxu0 0.0
      %850 = vmatprep.subr.mxu0 0.0
      %851 = vmatpush2.msra.mxu0 0.0
      %852 = vmatprep.subr.mxu0 0.0
      %853 = vmatpush2.msra.mxu0 0.0
      %854 = vmatprep.subr.mxu0 0.0
      %855 = vmatpush2.msra.mxu0 0.0
      %856 = vmatprep.subr.mxu0 0.0
      %857 = vmatpush2.msra.mxu0 0.0
      %858 = vmatprep.subr.mxu0 0.0
      %859 = vmatpush2.msra.mxu0 0.0
      %860 = vmatprep.subr.mxu0 0.0
      %861 = vmatpush2.msra.mxu0 0.0
      %862 = vmatprep.subr.mxu0 0.0
      %863 = vmatpush2.msra.mxu0 0.0
      %864 = vmatprep.subr.mxu0 0.0
      %865 = vmatpush2.msra.mxu0 0.0
      %866 = vmatprep.subr.mxu0 0.0
      %867 = vmatpush2.msra.mxu0 0.0
      %868 = vmatprep.subr.mxu0 0.0
      %869 = vmatpush2.msra.mxu0 0.0
      %870 = vmatprep.subr.mxu0 0.0
      %871 = vmatpush2.msra.mxu0 0.0
      %872 = vmatprep.mubr.f32.mxu0 0.0
      %873 = vmatmul.mubr.f32.gmra.mxu0 %v577
      %v874 = vpop.f32.mrf.mxu0
      %v875 = vadd.f32 %v572, %v874
      %v876 = vpop.f32.mrf.mxu0
      %v877 = vadd.f32 %v574, %v876
      %878 = vdwg.mxu0
      %s879 = scalar_lea.vmem %s1, 16
      %v880 = vld [vmem:[%s879] sm:$0xff]
      %881 = vrot.lane.b32.xlu0 %v171, 64
      %v882 = vpop.permute.xlu0 %881
      %883 = vrot.lane.b32.xlu0 %v172, 64
      %v884 = vpop.permute.xlu0 %883
      %885 = vrot.lane.b32.xlu0 %v173, 64
      %v886 = vpop.permute.xlu0 %885
      %887 = vrot.lane.b32.xlu0 %v174, 64
      %v888 = vpop.permute.xlu0 %887
      %889 = vrot.lane.b32.xlu0 %v175, 64
      %v890 = vpop.permute.xlu0 %889
      %891 = vrot.lane.b32.xlu0 %v176, 64
      %v892 = vpop.permute.xlu0 %891
      %893 = vrot.lane.b32.xlu0 %v177, 64
      %v894 = vpop.permute.xlu0 %893
      %895 = vrot.lane.b32.xlu0 %v178, 64
      %v896 = vpop.permute.xlu0 %895
      %897 = vrot.lane.b32.xlu0 %v188, 64
      %v898 = vpop.permute.xlu0 %897
      %899 = vrot.lane.b32.xlu0 %v179, 64
      %v900 = vpop.permute.xlu0 %899
      %901 = vrot.lane.b32.xlu0 %v180, 64
      %v902 = vpop.permute.xlu0 %901
      %903 = vrot.lane.b32.xlu0 %v181, 64
      %v904 = vpop.permute.xlu0 %903
      %905 = vrot.lane.b32.xlu0 %v182, 64
      %v906 = vpop.permute.xlu0 %905
      %907 = vrot.lane.b32.xlu0 %v183, 64
      %v908 = vpop.permute.xlu0 %907
      %909 = vrot.lane.b32.xlu0 %v184, 64
      %v910 = vpop.permute.xlu0 %909
      %911 = vrot.lane.b32.xlu0 %v185, 64
      %v912 = vpop.permute.xlu0 %911
      %913 = vrot.lane.b32.xlu0 %v186, 64
      %v914 = vpop.permute.xlu0 %913
      %915 = vrot.lane.b32.xlu0 %v189, 64
      %v916 = vpop.permute.xlu0 %915
      %vm917 = vcmask 523264
      %v918 = vsel %vm917, %v882, %v884
      %v919 = vsel %vm917, %v884, %v886
      %v920 = vsel %vm917, %v886, %v888
      %v921 = vsel %vm917, %v888, %v890
      %v922 = vsel %vm917, %v890, %v892
      %v923 = vsel %vm917, %v892, %v894
      %v924 = vsel %vm917, %v894, %v896
      %v925 = vsel %vm917, %v896, %v898
      %v926 = vsel %vm917, %v900, %v902
      %v927 = vsel %vm917, %v902, %v904
      %v928 = vsel %vm917, %v904, %v906
      %v929 = vsel %vm917, %v906, %v908
      %v930 = vsel %vm917, %v908, %v910
      %v931 = vsel %vm917, %v910, %v912
      %v932 = vsel %vm917, %v912, %v914
      %v933 = vsel %vm917, %v914, %v916
      %v943 = vsel %vm271, %v880, 0
      %v945 = vsel %vm275, %v926, 0
      %v947 = vsel %vm275, %v927, 0
      %v949 = vsel %vm275, %v928, 0
      %v951 = vsel %vm275, %v929, 0
      %v953 = vsel %vm275, %v930, 0
      %v955 = vsel %vm275, %v931, 0
      %v957 = vsel %vm275, %v932, 0
      %v959 = vsel %vm275, %v933, 0
      %961 = vmatprep.subr.mxu0 0.0
      %962 = vmatpush1.msra.mxu0 0.0
      %963 = vmatprep.subr.mxu0 0.0
      %964 = vmatpush1.msra.mxu0 0.0
      %965 = vmatprep.subr.mxu0 0.0
      %966 = vmatpush1.msra.mxu0 0.0
      %967 = vmatprep.subr.mxu0 0.0
      %968 = vmatpush1.msra.mxu0 0.0
      %969 = vmatprep.subr.mxu0 0.0
      %970 = vmatpush1.msra.mxu0 0.0
      %971 = vmatprep.subr.mxu0 0.0
      %972 = vmatpush1.msra.mxu0 0.0
      %973 = vmatprep.subr.mxu0 0.0
      %974 = vmatpush1.msra.mxu0 0.0
      %975 = vmatprep.subr.mxu0 0.0
      %976 = vmatpush1.msra.mxu0 0.0
      %977 = vmatprep.subr.mxu0 0.0
      %978 = vmatpush1.msra.mxu0 0.0
      %979 = vmatprep.subr.mxu0 0.0
      %980 = vmatpush1.msra.mxu0 0.0
      %981 = vmatprep.subr.mxu0 0.0
      %982 = vmatpush1.msra.mxu0 0.0
      %983 = vmatprep.subr.mxu0 0.0
      %984 = vmatpush1.msra.mxu0 0.0
      %985 = vmatprep.subr.mxu0 0.0
      %986 = vmatpush1.msra.mxu0 0.0
      %987 = vmatprep.subr.mxu0 0.0
      %988 = vmatpush1.msra.mxu0 0.0
      %989 = vmatprep.subr.mxu0 %v947
      %990 = vmatpush1.msra.mxu0 %v945
      %991 = vmatprep.subr.mxu0 %v919
      %992 = vmatpush1.msra.mxu0 %v918
      %993 = vmatprep.subr.mxu0 0.0
      %994 = vmatpush2.msra.mxu0 0.0
      %995 = vmatprep.subr.mxu0 0.0
      %996 = vmatpush2.msra.mxu0 0.0
      %997 = vmatprep.subr.mxu0 0.0
      %998 = vmatpush2.msra.mxu0 0.0
      %999 = vmatprep.subr.mxu0 0.0
      %1000 = vmatpush2.msra.mxu0 0.0
      %1001 = vmatprep.subr.mxu0 0.0
      %1002 = vmatpush2.msra.mxu0 0.0
      %1003 = vmatprep.subr.mxu0 0.0
      %1004 = vmatpush2.msra.mxu0 0.0
      %1005 = vmatprep.subr.mxu0 0.0
      %1006 = vmatpush2.msra.mxu0 0.0
      %1007 = vmatprep.subr.mxu0 0.0
      %1008 = vmatpush2.msra.mxu0 0.0
      %1009 = vmatprep.subr.mxu0 0.0
      %1010 = vmatpush2.msra.mxu0 0.0
      %1011 = vmatprep.subr.mxu0 0.0
      %1012 = vmatpush2.msra.mxu0 0.0
      %1013 = vmatprep.subr.mxu0 0.0
      %1014 = vmatpush2.msra.mxu0 0.0
      %1015 = vmatprep.subr.mxu0 0.0
      %1016 = vmatpush2.msra.mxu0 0.0
      %1017 = vmatprep.subr.mxu0 0.0
      %1018 = vmatpush2.msra.mxu0 0.0
      %1019 = vmatprep.subr.mxu0 0.0
      %1020 = vmatpush2.msra.mxu0 0.0
      %1021 = vmatprep.subr.mxu0 0.0
      %1022 = vmatpush2.msra.mxu0 0.0
      %1023 = vmatprep.subr.mxu0 0.0
      %1024 = vmatpush2.msra.mxu0 0.0
      %1025 = vmatprep.mubr.f32.mxu0 0.0
      %1026 = vmatmul.mubr.f32.gmra.mxu0 %v943
      %v1027 = vpop.f32.mrf.mxu0
      %v1028 = vadd.f32 0.0, %v1027
      %v1029 = vpop.f32.mrf.mxu0
      %v1030 = vadd.f32 0.0, %v1029
      %1031 = vdwg.mxu0
      %1032 = vmatprep.subr.mxu0 0.0
      %1033 = vmatpush1.msra.mxu0 0.0
      %1034 = vmatprep.subr.mxu0 0.0
      %1035 = vmatpush1.msra.mxu0 0.0
      %1036 = vmatprep.subr.mxu0 0.0
      %1037 = vmatpush1.msra.mxu0 0.0
      %1038 = vmatprep.subr.mxu0 0.0
      %1039 = vmatpush1.msra.mxu0 0.0
      %1040 = vmatprep.subr.mxu0 0.0
      %1041 = vmatpush1.msra.mxu0 0.0
      %1042 = vmatprep.subr.mxu0 0.0
      %1043 = vmatpush1.msra.mxu0 0.0
      %1044 = vmatprep.subr.mxu0 0.0
      %1045 = vmatpush1.msra.mxu0 0.0
      %1046 = vmatprep.subr.mxu0 0.0
      %1047 = vmatpush1.msra.mxu0 0.0
      %1048 = vmatprep.subr.mxu0 0.0
      %1049 = vmatpush1.msra.mxu0 0.0
      %1050 = vmatprep.subr.mxu0 0.0
      %1051 = vmatpush1.msra.mxu0 0.0
      %1052 = vmatprep.subr.mxu0 0.0
      %1053 = vmatpush1.msra.mxu0 0.0
      %1054 = vmatprep.subr.mxu0 0.0
      %1055 = vmatpush1.msra.mxu0 0.0
      %1056 = vmatprep.subr.mxu0 0.0
      %1057 = vmatpush1.msra.mxu0 0.0
      %1058 = vmatprep.subr.mxu0 0.0
      %1059 = vmatpush1.msra.mxu0 0.0
      %1060 = vmatprep.subr.mxu0 %v951
      %1061 = vmatpush1.msra.mxu0 %v949
      %1062 = vmatprep.subr.mxu0 %v921
      %1063 = vmatpush1.msra.mxu0 %v920
      %1064 = vmatprep.subr.mxu0 0.0
      %1065 = vmatpush2.msra.mxu0 0.0
      %1066 = vmatprep.subr.mxu0 0.0
      %1067 = vmatpush2.msra.mxu0 0.0
      %1068 = vmatprep.subr.mxu0 0.0
      %1069 = vmatpush2.msra.mxu0 0.0
      %1070 = vmatprep.subr.mxu0 0.0
      %1071 = vmatpush2.msra.mxu0 0.0
      %1072 = vmatprep.subr.mxu0 0.0
      %1073 = vmatpush2.msra.mxu0 0.0
      %1074 = vmatprep.subr.mxu0 0.0
      %1075 = vmatpush2.msra.mxu0 0.0
      %1076 = vmatprep.subr.mxu0 0.0
      %1077 = vmatpush2.msra.mxu0 0.0
      %1078 = vmatprep.subr.mxu0 0.0
      %1079 = vmatpush2.msra.mxu0 0.0
      %1080 = vmatprep.subr.mxu0 0.0
      %1081 = vmatpush2.msra.mxu0 0.0
      %1082 = vmatprep.subr.mxu0 0.0
      %1083 = vmatpush2.msra.mxu0 0.0
      %1084 = vmatprep.subr.mxu0 0.0
      %1085 = vmatpush2.msra.mxu0 0.0
      %1086 = vmatprep.subr.mxu0 0.0
      %1087 = vmatpush2.msra.mxu0 0.0
      %1088 = vmatprep.subr.mxu0 0.0
      %1089 = vmatpush2.msra.mxu0 0.0
      %1090 = vmatprep.subr.mxu0 0.0
      %1091 = vmatpush2.msra.mxu0 0.0
      %1092 = vmatprep.subr.mxu0 0.0
      %1093 = vmatpush2.msra.mxu0 0.0
      %1094 = vmatprep.subr.mxu0 0.0
      %1095 = vmatpush2.msra.mxu0 0.0
      %1096 = vmatprep.mubr.f32.mxu0 0.0
      %1097 = vmatmul.mubr.f32.gmra.mxu0 %v943
      %v1098 = vpop.f32.mrf.mxu0
      %v1099 = vadd.f32 0.0, %v1098
      %v1100 = vpop.f32.mrf.mxu0
      %v1101 = vadd.f32 0.0, %v1100
      %1102 = vdwg.mxu0
      %1103 = vmatprep.subr.mxu0 0.0
      %1104 = vmatpush1.msra.mxu0 0.0
      %1105 = vmatprep.subr.mxu0 0.0
      %1106 = vmatpush1.msra.mxu0 0.0
      %1107 = vmatprep.subr.mxu0 0.0
      %1108 = vmatpush1.msra.mxu0 0.0
      %1109 = vmatprep.subr.mxu0 0.0
      %1110 = vmatpush1.msra.mxu0 0.0
      %1111 = vmatprep.subr.mxu0 0.0
      %1112 = vmatpush1.msra.mxu0 0.0
      %1113 = vmatprep.subr.mxu0 0.0
      %1114 = vmatpush1.msra.mxu0 0.0
      %1115 = vmatprep.subr.mxu0 0.0
      %1116 = vmatpush1.msra.mxu0 0.0
      %1117 = vmatprep.subr.mxu0 0.0
      %1118 = vmatpush1.msra.mxu0 0.0
      %1119 = vmatprep.subr.mxu0 0.0
      %1120 = vmatpush1.msra.mxu0 0.0
      %1121 = vmatprep.subr.mxu0 0.0
      %1122 = vmatpush1.msra.mxu0 0.0
      %1123 = vmatprep.subr.mxu0 0.0
      %1124 = vmatpush1.msra.mxu0 0.0
      %1125 = vmatprep.subr.mxu0 0.0
      %1126 = vmatpush1.msra.mxu0 0.0
      %1127 = vmatprep.subr.mxu0 0.0
      %1128 = vmatpush1.msra.mxu0 0.0
      %1129 = vmatprep.subr.mxu0 0.0
      %1130 = vmatpush1.msra.mxu0 0.0
      %1131 = vmatprep.subr.mxu0 %v955
      %1132 = vmatpush1.msra.mxu0 %v953
      %1133 = vmatprep.subr.mxu0 %v923
      %1134 = vmatpush1.msra.mxu0 %v922
      %1135 = vmatprep.subr.mxu0 0.0
      %1136 = vmatpush2.msra.mxu0 0.0
      %1137 = vmatprep.subr.mxu0 0.0
      %1138 = vmatpush2.msra.mxu0 0.0
      %1139 = vmatprep.subr.mxu0 0.0
      %1140 = vmatpush2.msra.mxu0 0.0
      %1141 = vmatprep.subr.mxu0 0.0
      %1142 = vmatpush2.msra.mxu0 0.0
      %1143 = vmatprep.subr.mxu0 0.0
      %1144 = vmatpush2.msra.mxu0 0.0
      %1145 = vmatprep.subr.mxu0 0.0
      %1146 = vmatpush2.msra.mxu0 0.0
      %1147 = vmatprep.subr.mxu0 0.0
      %1148 = vmatpush2.msra.mxu0 0.0
      %1149 = vmatprep.subr.mxu0 0.0
      %1150 = vmatpush2.msra.mxu0 0.0
      %1151 = vmatprep.subr.mxu0 0.0
      %1152 = vmatpush2.msra.mxu0 0.0
      %1153 = vmatprep.subr.mxu0 0.0
      %1154 = vmatpush2.msra.mxu0 0.0
      %1155 = vmatprep.subr.mxu0 0.0
      %1156 = vmatpush2.msra.mxu0 0.0
      %1157 = vmatprep.subr.mxu0 0.0
      %1158 = vmatpush2.msra.mxu0 0.0
      %1159 = vmatprep.subr.mxu0 0.0
      %1160 = vmatpush2.msra.mxu0 0.0
      %1161 = vmatprep.subr.mxu0 0.0
      %1162 = vmatpush2.msra.mxu0 0.0
      %1163 = vmatprep.subr.mxu0 0.0
      %1164 = vmatpush2.msra.mxu0 0.0
      %1165 = vmatprep.subr.mxu0 0.0
      %1166 = vmatpush2.msra.mxu0 0.0
      %1167 = vmatprep.mubr.f32.mxu0 0.0
      %1168 = vmatmul.mubr.f32.gmra.mxu0 %v943
      %v1169 = vpop.f32.mrf.mxu0
      %v1170 = vadd.f32 0.0, %v1169
      %v1171 = vpop.f32.mrf.mxu0
      %v1172 = vadd.f32 0.0, %v1171
      %1173 = vdwg.mxu0
      %1174 = vmatprep.subr.mxu0 0.0
      %1175 = vmatpush1.msra.mxu0 0.0
      %1176 = vmatprep.subr.mxu0 0.0
      %1177 = vmatpush1.msra.mxu0 0.0
      %1178 = vmatprep.subr.mxu0 0.0
      %1179 = vmatpush1.msra.mxu0 0.0
      %1180 = vmatprep.subr.mxu0 0.0
      %1181 = vmatpush1.msra.mxu0 0.0
      %1182 = vmatprep.subr.mxu0 0.0
      %1183 = vmatpush1.msra.mxu0 0.0
      %1184 = vmatprep.subr.mxu0 0.0
      %1185 = vmatpush1.msra.mxu0 0.0
      %1186 = vmatprep.subr.mxu0 0.0
      %1187 = vmatpush1.msra.mxu0 0.0
      %1188 = vmatprep.subr.mxu0 0.0
      %1189 = vmatpush1.msra.mxu0 0.0
      %1190 = vmatprep.subr.mxu0 0.0
      %1191 = vmatpush1.msra.mxu0 0.0
      %1192 = vmatprep.subr.mxu0 0.0
      %1193 = vmatpush1.msra.mxu0 0.0
      %1194 = vmatprep.subr.mxu0 0.0
      %1195 = vmatpush1.msra.mxu0 0.0
      %1196 = vmatprep.subr.mxu0 0.0
      %1197 = vmatpush1.msra.mxu0 0.0
      %1198 = vmatprep.subr.mxu0 0.0
      %1199 = vmatpush1.msra.mxu0 0.0
      %1200 = vmatprep.subr.mxu0 0.0
      %1201 = vmatpush1.msra.mxu0 0.0
      %1202 = vmatprep.subr.mxu0 %v959
      %1203 = vmatpush1.msra.mxu0 %v957
      %1204 = vmatprep.subr.mxu0 %v925
      %1205 = vmatpush1.msra.mxu0 %v924
      %1206 = vmatprep.subr.mxu0 0.0
      %1207 = vmatpush2.msra.mxu0 0.0
      %1208 = vmatprep.subr.mxu0 0.0
      %1209 = vmatpush2.msra.mxu0 0.0
      %1210 = vmatprep.subr.mxu0 0.0
      %1211 = vmatpush2.msra.mxu0 0.0
      %1212 = vmatprep.subr.mxu0 0.0
      %1213 = vmatpush2.msra.mxu0 0.0
      %1214 = vmatprep.subr.mxu0 0.0
      %1215 = vmatpush2.msra.mxu0 0.0
      %1216 = vmatprep.subr.mxu0 0.0
      %1217 = vmatpush2.msra.mxu0 0.0
      %1218 = vmatprep.subr.mxu0 0.0
      %1219 = vmatpush2.msra.mxu0 0.0
      %1220 = vmatprep.subr.mxu0 0.0
      %1221 = vmatpush2.msra.mxu0 0.0
      %1222 = vmatprep.subr.mxu0 0.0
      %1223 = vmatpush2.msra.mxu0 0.0
      %1224 = vmatprep.subr.mxu0 0.0
      %1225 = vmatpush2.msra.mxu0 0.0
      %1226 = vmatprep.subr.mxu0 0.0
      %1227 = vmatpush2.msra.mxu0 0.0
      %1228 = vmatprep.subr.mxu0 0.0
      %1229 = vmatpush2.msra.mxu0 0.0
      %1230 = vmatprep.subr.mxu0 0.0
      %1231 = vmatpush2.msra.mxu0 0.0
      %1232 = vmatprep.subr.mxu0 0.0
      %1233 = vmatpush2.msra.mxu0 0.0
      %1234 = vmatprep.subr.mxu0 0.0
      %1235 = vmatpush2.msra.mxu0 0.0
      %1236 = vmatprep.subr.mxu0 0.0
      %1237 = vmatpush2.msra.mxu0 0.0
      %1238 = vmatprep.mubr.f32.mxu0 0.0
      %1239 = vmatmul.mubr.f32.gmra.mxu0 %v943
      %v1240 = vpop.f32.mrf.mxu0
      %v1241 = vadd.f32 0.0, %v1240
      %v1242 = vpop.f32.mrf.mxu0
      %v1243 = vadd.f32 0.0, %v1242
      %1244 = vdwg.mxu0
      %v1245 = vadd.f32 %v662, %v1028
      %v1246 = vadd.f32 %v664, %v1030
      %v1247 = vadd.f32 %v733, %v1099
      %v1248 = vadd.f32 %v735, %v1101
      %v1249 = vadd.f32 %v804, %v1170
      %v1250 = vadd.f32 %v806, %v1172
      %v1251 = vadd.f32 %v875, %v1241
      %v1252 = vadd.f32 %v877, %v1243
      %v1253 = vld [vmem:[%s2] sm:$0xff]
      %1255 = vset.pattern.permute.xlu0 0
      %1256 = vperm.xlu0 %1255, %v1253
      %v1257 = vpop.permute.xlu0 %1256
      %v1259 = vadd.f32 %v1245, %v1257
      %v1260 = vadd.f32 %v1246, %v1257
      %v1261 = vadd.f32 %v1247, %v1257
      %v1262 = vadd.f32 %v1248, %v1257
      %v1263 = vadd.f32 %v1249, %v1257
      %v1264 = vadd.f32 %v1250, %v1257
      %v1265 = vadd.f32 %v1251, %v1257
      %v1266 = vadd.f32 %v1252, %v1257
      %1267 = vst [vmem:[%s170] sm:$0xff] %v1259
      %1268 = vst [vmem:[%s170 + $0x8] sm:$0xff] %v1260
      %1269 = vst [vmem:[%s170 + $0x10] sm:$0xff] %v1261
      %1270 = vst [vmem:[%s170 + $0x18] sm:$0xff] %v1262
      %1271 = vst [vmem:[%s170 + $0x20] sm:$0xff] %v1263
      %1272 = vst [vmem:[%s170 + $0x28] sm:$0xff] %v1264
      %1273 = vst [vmem:[%s170 + $0x30] sm:$0xff] %v1265
      %1274 = vst [vmem:[%s170 + $0x38] sm:$0xff] %v1266
      %p1275 = scmp.lt.s32.totalorder %s14, 1
      %s1276 = scalar_select %p1275, %s14, 1
      %s1277 = smul.addr %s1276, 8
      %s1278 = smul.addr %s1277, 8
      %s1279 = scalar_lea.vmem %s3, %s1278
      // Predicated region
      $region33: #{upscale_block_apply.1} parent=31 // pred_check
        %p1280 = pneg %p100
      $region34: #{upscale_block_apply.1} parent=31 // pred_check_branch
        %1282 = sbr.rel (%p1280) target = $region36
      $region35: #{upscale_block_apply.1} parent=31 // pred_region
        _
      $region36: #{upscale_block_apply.1} parent=31 // pred_fallthru
        _
    $region32: #{upscale_block_apply.1} parent=5 // pred_fallthru
      _
    %p1283 = scmp.le.s32.totalorder 2, %s9
    // Predicated region
    $region37: #{upscale_block_apply.1} parent=5 // pred_check
      %p1284 = pneg %p1283
    $region38: #{upscale_block_apply.1} parent=5 // pred_check_branch
      %1286 = sbr.rel (%p1284) target = $region40
    $region39: #{upscale_block_apply.1} parent=5 // pred_region
      %s1287 = ssub.s32 %s9, 2
      // Predicated region
      $region41: #{upscale_block_apply.1} parent=39 // pred_check
        %p1288 = pneg %p106
      $region42: #{upscale_block_apply.1} parent=39 // pred_check_branch
        %1290 = sbr.rel (%p1288) target = $region44
      $region43: #{upscale_block_apply.1} parent=39 // pred_region
        %p1291 = scmp.lt.s32.totalorder %s15, 1
        %s1292 = scalar_select %p1291, %s15, 1
        %s1293 = smul.addr %s1292, 8
        %s1294 = smul.addr %s1293, 8
        %s1295 = scalar_lea.vmem %s3, %s1294
      $region44: #{upscale_block_apply.1} parent=39 // pred_fallthru
        _
    $region40: #{upscale_block_apply.1} parent=5 // pred_fallthru
      _
  $region6: #{upscale_block_apply.1} parent=0 // loop_footer
    %s13 = sadd.s32 1, %s9
  $region7: #{upscale_block_apply.1} parent=0 // loop_footer_branch
    %8 = sbr.rel target = $region3
  $region8: #{upscale_block_apply.1} parent=0 // loop_exit
    _

</llo_original>
